<compile_context>
chip_gen: v7x
topology: tpu7x:2x2x1
jax: 0.10.0
libtpu: 0.0.40
codegen_flags: <defaults>
</compile_context>

<pallas_src>
from functools import partial

import jax
import jax.numpy as jnp
from jax.experimental import pallas as pl
from jax.experimental.pallas import tpu as pltpu


def _round_up(x: int, m: int) -> int:
    return ((x + m - 1) // m) * m


def _patch_gemm(x3, w_mat, bias, *, out_dtype=jnp.float32,
                max_ts=512, max_tn=512):
    """out[b, n, s] = sum_k x3[b, s, k] * w_mat[k, n] + bias[n].

    x3:    (B, S, K) bf16  (im2col'd patches, S = Hp*Wp, K = Cin*P*P)
    w_mat: (K, N)    bf16  (flattened conv weight)
    bias:  (N,)      f32
    Returns (B, N, S) in `out_dtype` -- i.e. directly in the PyTorch Conv2d
    output layout (channels-major), so no post-kernel transpose is needed.
    """
    B, S, K = x3.shape
    K2, N = w_mat.shape
    assert K == K2

    # --- tile selection -----------------------------------------------------
    # S (spatial) axis: full-dim block when it fits (always layout-legal),
    # otherwise 128-multiple tiles (lane-dense output stores, 16-aligned
    # sublanes for bf16 loads).
    if S <= max_ts:
        ts, Sp = S, S
    else:
        ts = max_ts                      # multiple of 128
        Sp = _round_up(S, ts)
    # N (hidden) axis: whole weight resident (weight-stationary) when it fits,
    # otherwise 128-multiple tiles.  K is never padded or tiled.
    if N <= max_tn:
        tn, Np = N, N
    else:
        tn = max_tn                      # multiple of 128
        Np = _round_up(N, tn)

    if Sp != S:
        x3 = jnp.pad(x3, ((0, 0), (0, Sp - S), (0, 0)))
    b2 = bias.reshape(1, N).astype(jnp.float32)
    if Np != N:
        w_mat = jnp.pad(w_mat, ((0, 0), (0, Np - N)))
        b2 = jnp.pad(b2, ((0, 0), (0, Np - N)))

    n_n, n_s = Np // tn, Sp // ts
    # Grid order (n_n, B, n_s): the weight / bias block index depends only on
    # the *outermost* axis, so they are fetched n_n times total (once in the
    # common n_n == 1 case) instead of once per M block.
    grid = (n_n, B, n_s)

    def kernel(x_ref, w_ref, b_ref, o_ref):
        # x_ref: (1, ts, K) bf16; w_ref: (K, tn) bf16; b_ref: (1, tn) f32
        # o_ref: (1, tn, ts) out_dtype
        acc = jnp.dot(x_ref[0], w_ref[...],
                      preferred_element_type=jnp.float32)      # (ts, tn) f32
        acc = acc + b_ref[...]                                  # bias add
        # In-kernel XLU transpose -> store in channels-major conv layout.
        o_ref[0] = acc.T.astype(o_ref.dtype)                    # (tn, ts)

    out_itemsize = jnp.dtype(out_dtype).itemsize
    # Double-buffered per-step footprint (weight/bias are only fetched once
    # but budget x2 to stay conservative).
    vmem_bytes = 2 * (ts * K * x3.dtype.itemsize
                      + K * tn * w_mat.dtype.itemsize
                      + tn * 4
                      + tn * ts * out_itemsize)
    vmem_limit = int(max(vmem_bytes + (4 << 20), 16 << 20))

    out = pl.pallas_call(
        kernel,
        out_shape=jax.ShapeDtypeStruct((B, Np, Sp), out_dtype),
        grid_spec=pltpu.PrefetchScalarGridSpec(
            num_scalar_prefetch=0,
            grid=grid,
            in_specs=[
                pl.BlockSpec((1, ts, K), lambda j, b, s: (b, s, 0)),
                pl.BlockSpec((K, tn),    lambda j, b, s: (0, j)),
                pl.BlockSpec((1, tn),    lambda j, b, s: (0, j)),
            ],
            out_specs=pl.BlockSpec((1, tn, ts), lambda j, b, s: (b, j, s)),
        ),
        compiler_params=pltpu.CompilerParams(
            dimension_semantics=("parallel", "parallel", "parallel"),
            vmem_limit_bytes=vmem_limit,
        ),
        cost_estimate=pl.CostEstimate(
            flops=2 * B * Sp * K * Np,
            transcendentals=0,
            bytes_accessed=(B * Sp * K * x3.dtype.itemsize
                            + K * Np * w_mat.dtype.itemsize
                            + Np * 4
                            + B * Np * Sp * out_itemsize),
        ),
    )(x3, w_mat, b2)

    if Np != N or Sp != S:
        out = out[:, :N, :S]
    return out


@partial(jax.jit, static_argnames=("patch_size",))
def _patch_embedding_forward(x, weight, bias, *, patch_size):
    # x: (B, Cin, H, W) NCHW, weight: (Cout, Cin, P, P), bias: (Cout,)
    B, Cin, H, W = x.shape
    P = patch_size
    assert H % P == 0 and W % P == 0
    Hp, Wp = H // P, W // P
    Cout = weight.shape[0]
    K = Cin * P * P

    # im2col staging: cast to bf16 FIRST so the only remaining HBM staging
    # copy (the transpose) moves 2 B/elt; under jit the convert fuses into it.
    # TODO(synk): express the patch gather via the kernel's BlockSpec/index_map
    # on the raw NCHW tensor to remove this staging copy entirely.
    xp = x.astype(jnp.bfloat16).reshape(B, Cin, Hp, P, Wp, P)
    xp = jnp.transpose(xp, (0, 2, 4, 1, 3, 5))          # (B, Hp, Wp, Cin, P, P)
    x3 = xp.reshape(B, Hp * Wp, K)

    w_mat = weight.reshape(Cout, K).T.astype(jnp.bfloat16)   # (K, Cout)

    # Kernel emits the PyTorch Conv2d output layout (B, Cout, Hp*Wp) directly.
    y = _patch_gemm(x3, w_mat, bias, out_dtype=jnp.float32)

    # PyTorch module's raw reshape (B, C, Hp, Wp) -> (B, Hp*Wp, C): a pure
    # memory-order reinterpretation of the channels-major block -> no copy.
    return y.reshape(B, Hp * Wp, Cout)


class PatchEmbedding:
    """JAX/Pallas port of the PyTorch PatchEmbedding module."""

    def __init__(self, in_channels: int, hidden_dim: int, width: int,
                 patch_size: int, key):
        self.in_channels = in_channels
        self.hidden_dim = hidden_dim
        self.width = width
        self.patch_size = patch_size
        kw, kb = jax.random.split(key)
        # Conv2d default init: U(-1/sqrt(fan_in), 1/sqrt(fan_in))
        fan_in = in_channels * patch_size * patch_size
        bound = 1.0 / (fan_in ** 0.5)
        self.weight = jax.random.uniform(
            kw, (hidden_dim, in_channels, patch_size, patch_size),
            minval=-bound, maxval=bound, dtype=jnp.float32)
        self.bias = jax.random.uniform(
            kb, (hidden_dim,), minval=-bound, maxval=bound, dtype=jnp.float32)

    def __call__(self, x):
        return _patch_embedding_forward(x, self.weight, self.bias,
                                        patch_size=self.patch_size)


def _reference(x, weight, bias, patch_size):
    """Pure-JAX f32 reference of the PyTorch forward."""
    B, Cin, H, W = x.shape
    P = patch_size
    Hp, Wp = H // P, W // P
    Cout = weight.shape[0]
    # Stride-P Conv2d: contract over (Cin, kernel-h, kernel-w).
    patches = jnp.einsum(
        'bchpwq,ocpq->bohw',
        x.reshape(B, Cin, Hp, P, Wp, P),
        weight,
    ) + bias[None, :, None, None]
    # PyTorch module's raw reshape (interleaves channels/spatial).
    return patches.reshape(B, Hp * Wp, Cout)


if __name__ == "__main__":
    key = jax.random.PRNGKey(0)
    k_param, k_x = jax.random.split(key)

    in_channels, hidden_dim, width, patch_size = 4, 32, 16, 4
    batch = 2

    mod = PatchEmbedding(in_channels, hidden_dim, width, patch_size, k_param)

    x = jax.random.normal(k_x, (batch, in_channels, width, width),
                          dtype=jnp.float32)

    out = mod(x)
    out = jax.block_until_ready(out)

    ref = _reference(x, mod.weight, mod.bias, patch_size)
    assert out.shape == (batch, (width // patch_size) ** 2, hidden_dim)
    # bf16 MXU operands with f32 accumulation -> loosened tolerance vs f32 ref.
    assert jnp.allclose(out, ref, atol=3e-2, rtol=3e-2), \
        float(jnp.max(jnp.abs(out - ref)))

    print("KERNEL_OK")
</pallas_src>

<mosaic_0001>
module attributes {stable_mosaic.version = 11 : i64} {
  func.func @kernel(%arg0: i32, %arg1: i32, %arg2: i32, %arg3: memref<1x16x64xbf16, #tpu.memory_space<vmem>>, %arg4: memref<64x32xbf16, #tpu.memory_space<vmem>>, %arg5: memref<1x32xf32, #tpu.memory_space<vmem>>, %arg6: memref<1x32x16xf32, #tpu.memory_space<vmem>>) attributes {dimension_semantics = [#tpu.dimension_semantics<parallel>, #tpu.dimension_semantics<parallel>, #tpu.dimension_semantics<parallel>], iteration_bounds = array<i64: 1, 2, 1>, scalar_prefetch = 0 : i64, scratch_operands = 0 : i64, tpu.core_type = #tpu.core_type<tc>, window_params = [{transform_indices = @transform_0, window_bounds = array<i64: 1, 16, 64>}, {transform_indices = @transform_1, window_bounds = array<i64: 64, 32>}, {transform_indices = @transform_2, window_bounds = array<i64: 1, 32>}, {transform_indices = @transform_3, window_bounds = array<i64: 1, 32, 16>}]} {
    %c0 = arith.constant 0 : index
    %c0_0 = arith.constant 0 : index
    %c0_1 = arith.constant 0 : index
    %0 = vector.load %arg3[%c0, %c0_0, %c0_1] : memref<1x16x64xbf16, #tpu.memory_space<vmem>>, vector<1x16x64xbf16>
    %1 = vector.shape_cast %0 : vector<1x16x64xbf16> to vector<16x64xbf16>
    %c0_2 = arith.constant 0 : index
    %c0_3 = arith.constant 0 : index
    %2 = vector.load %arg4[%c0_2, %c0_3] : memref<64x32xbf16, #tpu.memory_space<vmem>>, vector<64x32xbf16>
    %cst = arith.constant dense<0.000000e+00> : vector<16x32xf32>
    %3 = tpu.matmul %1, %2, %cst {dimension_numbers = #tpu.dot_dimension_numbers<[1], [0], [0], [1], [0, 0, 1, 1], [], []>} : vector<16x64xbf16>, vector<64x32xbf16>, vector<16x32xf32> -> vector<16x32xf32>
    %c0_4 = arith.constant 0 : index
    %c0_5 = arith.constant 0 : index
    %4 = vector.load %arg5[%c0_4, %c0_5] : memref<1x32xf32, #tpu.memory_space<vmem>>, vector<1x32xf32>
    %5 = vector.broadcast %4 : vector<1x32xf32> to vector<16x32xf32>
    %6 = arith.addf %3, %5 : vector<16x32xf32>
    %7 = tpu.transpose %6, [1, 0] : vector<16x32xf32> -> vector<32x16xf32>
    %c0_6 = arith.constant 0 : index
    %c0_7 = arith.constant 0 : index
    %c0_8 = arith.constant 0 : index
    %8 = vector.load %arg6[%c0_6, %c0_7, %c0_8] : memref<1x32x16xf32, #tpu.memory_space<vmem>>, vector<1x32x16xf32>
    %9 = vector.shape_cast %8 : vector<1x32x16xf32> to vector<32x16xf32>
    %10 = vector.shape_cast %7 : vector<32x16xf32> to vector<1x32x16xf32>
    tpu.vector_store %arg6[%c0_6, %c0_7, %c0_8], %10 {strides = array<i32>} : memref<1x32x16xf32, #tpu.memory_space<vmem>>, vector<1x32x16xf32>,
    return
  }
  func.func @transform_0(%arg0: i32, %arg1: i32, %arg2: i32) -> (i32, i32, i32) {
    %c0_i32 = arith.constant 0 : i32
    %c0_i32_0 = arith.constant 0 : i32
    return %arg1, %arg2, %c0_i32 : i32, i32, i32
  }
  func.func @transform_1(%arg0: i32, %arg1: i32, %arg2: i32) -> (i32, i32) {
    %c0_i32 = arith.constant 0 : i32
    %c0_i32_0 = arith.constant 0 : i32
    return %c0_i32, %arg0 : i32, i32
  }
  func.func @transform_2(%arg0: i32, %arg1: i32, %arg2: i32) -> (i32, i32) {
    %c0_i32 = arith.constant 0 : i32
    %c0_i32_0 = arith.constant 0 : i32
    return %c0_i32, %arg0 : i32, i32
  }
  func.func @transform_3(%arg0: i32, %arg1: i32, %arg2: i32) -> (i32, i32, i32) {
    %c0_i32 = arith.constant 0 : i32
    return %arg1, %arg0, %arg2 : i32, i32, i32
  }
}

</mosaic_0001>

<llo_original>
// kernel: _patch_embedding_forward.1
$region0: #{_patch_embedding_forward.1}
  #allocation0 [shape = 'u32[]', space=smem, size = 0x4, offset = 0x4, fixed_abs, tag = 'smem constant byte address 0x4 - core index']
  #allocation1 [shape = 'u32[144,128]{1,0:T(1,128)}', space=vmem, size = 0x12000, scoped, tag = 'internal scratch']
  %s0 = inlined_call_operand.vmem [shape: bf16[2,16,64], index: 0, kind: input, shape index: {}]
  %s1 = inlined_call_operand.vmem [shape: bf16[64,32], index: 1, kind: input, shape index: {}]
  %s2 = inlined_call_operand.vmem [shape: f32[1,32], index: 2, kind: input, shape index: {}]
  %s3 = inlined_call_operand.vmem [shape: f32[2,32,16], index: 3, kind: output, shape index: {}]
  %s4 = sld [smem:[#allocation0]]
  $region45: #{_patch_embedding_forward.1} parent=0
    _
  %s6 = ssub.s32 1, %s4
  %s7 = scalar_select 0, %s6, %s4
  loop: start=0, step=1, limit=4
  $region2: #{_patch_embedding_forward.1} parent=0 // loop_pre_header
    _
  $region3: #{_patch_embedding_forward.1} parent=0 // loop_header
    %s9 = sphi 0, %s13
    %p10 = scmp.ge.s32.totalorder %s9, 4
    %s16 = sphi 0, %s35
    %s17 = sphi 0, %s31
    %s18 = sphi 0, %s27
    %s19 = sphi 0, %s16
    %s20 = sphi 0, %s17
    %s21 = sphi 0, %s18
    %s22 = sphi 0, %s19
    %s23 = sphi 0, %s20
    %s24 = sphi 0, %s21
    %s40 = sphi 0, %s42
    %s43 = sphi 0, %s40
    %s44 = sphi 0, %s43
    %s60 = sphi 0, %s44
    %s66 = sphi 0, %s68
    %s69 = sphi 0, %s66
    %s70 = sphi 0, %s69
    %s86 = sphi 0, %s70
    %s92 = sphi 0, %s94
    %s95 = sphi 0, %s92
    %s96 = sphi 0, %s95
    %s112 = sphi 0, %s96
    %s122 = sphi 0, %s124
    %s125 = sphi 0, %s122
    %s126 = sphi 0, %s125
    %s142 = sphi 0, %s126
  $region4: #{_patch_embedding_forward.1} parent=0 // loop_header_branch
    %12 = sbr.rel (%p10) target = $region8
  $region5: #{_patch_embedding_forward.1} parent=0 // loop_body
    %s14 = ssub.s32 %s9, 1
    %s15 = ssub.s32 %s9, 2
    %s25 = sadd.s32 1, %s18
    %p26 = scmp.ge.s32.totalorder %s25, 1
    %s27 = scalar_select %p26, 0, %s25
    %s28 = sadd.s32 1, %s17
    %s29 = scalar_select %p26, %s28, %s17
    %p30 = scmp.ge.s32.totalorder %s29, 2
    %s31 = scalar_select %p30, 0, %s29
    %s32 = sadd.s32 1, %s16
    %s33 = scalar_select %p30, %s32, %s16
    %p34 = scmp.ge.s32.totalorder %s33, 1
    %s35 = scalar_select %p34, 0, %s33
    %s36 = ssub.s32 %s17, %s31
    %s37 = ssub.s32 %s18, %s27
    %s38 = sor.u32 %s36, %s37
    %p39 = scmp.eq.s32.totalorder %s38, 0
    %s41 = sadd.s32 %s40, 1
    %s42 = scalar_select %p39, %s40, %s41
    %p45 = pneg %p39
    %p46 = scmp.eq.s32.totalorder %s9, 1
    %p47 = por %p45, %p46
    %p48 = scmp.ne.s32.totalorder %s40, %s43
    %p49 = scmp.eq.s32.totalorder %s9, 0
    %p50 = por %p48, %p49
    %p51 = scmp.ne.s32.totalorder %s40, %s43
    %p52 = scmp.eq.s32.totalorder %s14, 1
    %p53 = por %p51, %p52
    %p54 = scmp.ne.s32.totalorder %s43, %s44
    %p55 = scmp.eq.s32.totalorder %s14, 0
    %p56 = por %p54, %p55
    %p57 = scmp.ne.s32.totalorder %s43, %s44
    %p58 = scmp.eq.s32.totalorder %s15, 1
    %p59 = por %p57, %p58
    %p61 = scmp.ne.s32.totalorder %s44, %s60
    %p62 = scmp.eq.s32.totalorder %s15, 0
    %p63 = por %p61, %p62
    %s64 = ssub.s32 %s16, %s35
    %p65 = scmp.eq.s32.totalorder %s64, 0
    %s67 = sadd.s32 %s66, 1
    %s68 = scalar_select %p65, %s66, %s67
    %p71 = pneg %p65
    %p72 = scmp.eq.s32.totalorder %s9, 1
    %p73 = por %p71, %p72
    %p74 = scmp.ne.s32.totalorder %s66, %s69
    %p75 = scmp.eq.s32.totalorder %s9, 0
    %p76 = por %p74, %p75
    %p77 = scmp.ne.s32.totalorder %s66, %s69
    %p78 = scmp.eq.s32.totalorder %s14, 1
    %p79 = por %p77, %p78
    %p80 = scmp.ne.s32.totalorder %s69, %s70
    %p81 = scmp.eq.s32.totalorder %s14, 0
    %p82 = por %p80, %p81
    %p83 = scmp.ne.s32.totalorder %s69, %s70
    %p84 = scmp.eq.s32.totalorder %s15, 1
    %p85 = por %p83, %p84
    %p87 = scmp.ne.s32.totalorder %s70, %s86
    %p88 = scmp.eq.s32.totalorder %s15, 0
    %p89 = por %p87, %p88
    %s90 = ssub.s32 %s16, %s35
    %p91 = scmp.eq.s32.totalorder %s90, 0
    %s93 = sadd.s32 %s92, 1
    %s94 = scalar_select %p91, %s92, %s93
    %p97 = pneg %p91
    %p98 = scmp.eq.s32.totalorder %s9, 1
    %p99 = por %p97, %p98
    %p100 = scmp.ne.s32.totalorder %s92, %s95
    %p101 = scmp.eq.s32.totalorder %s9, 0
    %p102 = por %p100, %p101
    %p103 = scmp.ne.s32.totalorder %s92, %s95
    %p104 = scmp.eq.s32.totalorder %s14, 1
    %p105 = por %p103, %p104
    %p106 = scmp.ne.s32.totalorder %s95, %s96
    %p107 = scmp.eq.s32.totalorder %s14, 0
    %p108 = por %p106, %p107
    %p109 = scmp.ne.s32.totalorder %s95, %s96
    %p110 = scmp.eq.s32.totalorder %s15, 1
    %p111 = por %p109, %p110
    %p113 = scmp.ne.s32.totalorder %s96, %s112
    %p114 = scmp.eq.s32.totalorder %s15, 0
    %p115 = por %p113, %p114
    %s116 = ssub.s32 %s17, %s31
    %s117 = ssub.s32 %s16, %s35
    %s118 = sor.u32 %s116, %s117
    %s119 = ssub.s32 %s18, %s27
    %s120 = sor.u32 %s118, %s119
    %p121 = scmp.eq.s32.totalorder %s120, 0
    %s123 = sadd.s32 %s122, 1
    %s124 = scalar_select %p121, %s122, %s123
    %p127 = pneg %p121
    %p128 = scmp.eq.s32.totalorder %s9, 1
    %p129 = por %p127, %p128
    %p130 = scmp.ne.s32.totalorder %s122, %s125
    %p131 = scmp.eq.s32.totalorder %s9, 0
    %p132 = por %p130, %p131
    %p133 = scmp.ne.s32.totalorder %s122, %s125
    %p134 = scmp.eq.s32.totalorder %s14, 1
    %p135 = por %p133, %p134
    %p136 = scmp.ne.s32.totalorder %s125, %s126
    %p137 = scmp.eq.s32.totalorder %s14, 0
    %p138 = por %p136, %p137
    %p139 = scmp.ne.s32.totalorder %s125, %s126
    %p140 = scmp.eq.s32.totalorder %s15, 1
    %p141 = por %p139, %p140
    %p143 = scmp.ne.s32.totalorder %s126, %s142
    %p144 = scmp.eq.s32.totalorder %s15, 0
    %p145 = por %p143, %p144
    %p146 = scmp.le.s32.totalorder 1, %s9
    %p147 = scmp.lt.s32.totalorder %s9, 3
    %p148 = pnand %p146, %p147
    %p149 = pneg %p148
    // Predicated region
    $region9: #{_patch_embedding_forward.1} parent=5 // pred_check
      _
    $region10: #{_patch_embedding_forward.1} parent=5 // pred_check_branch
      %151 = sbr.rel (%p148) target = $region12
    $region11: #{_patch_embedding_forward.1} parent=5 // pred_region
      %s152 = ssub.s32 %s9, 1
      // Predicated region
      $region13: #{_patch_embedding_forward.1} parent=11 // pred_check
        %p153 = pneg %p82
      $region14: #{_patch_embedding_forward.1} parent=11 // pred_check_branch
        %155 = sbr.rel (%p153) target = $region16
      $region15: #{_patch_embedding_forward.1} parent=11 // pred_region
        %p156 = scmp.lt.s32.totalorder %s19, 0
        %s157 = scalar_select %p156, %s19, 0
        %s158 = smul.addr %s157, 4
        %s159 = scalar_lea.vmem %s1, %s158
      $region16: #{_patch_embedding_forward.1} parent=11 // pred_fallthru
        _
      // Predicated region
      $region17: #{_patch_embedding_forward.1} parent=11 // pred_check
        %p160 = pneg %p108
      $region18: #{_patch_embedding_forward.1} parent=11 // pred_check_branch
        %162 = sbr.rel (%p160) target = $region20
      $region19: #{_patch_embedding_forward.1} parent=11 // pred_region
        %p163 = scmp.lt.s32.totalorder %s19, 0
        %s164 = scalar_select %p163, %s19, 0
        %s165 = scalar_lea.vmem %s2, %s164
      $region20: #{_patch_embedding_forward.1} parent=11 // pred_fallthru
        _
    $region12: #{_patch_embedding_forward.1} parent=5 // pred_fallthru
      _
    %p166 = scmp.lt.s32.totalorder %s9, 2
    // Predicated region
    $region21: #{_patch_embedding_forward.1} parent=5 // pred_check
      %p167 = pneg %p166
    $region22: #{_patch_embedding_forward.1} parent=5 // pred_check_branch
      %169 = sbr.rel (%p167) target = $region24
    $region23: #{_patch_embedding_forward.1} parent=5 // pred_region
      // Predicated region
      $region25: #{_patch_embedding_forward.1} parent=23 // pred_check
        %p170 = pneg %p50
      $region26: #{_patch_embedding_forward.1} parent=23 // pred_check_branch
        %172 = sbr.rel (%p170) target = $region28
      $region27: #{_patch_embedding_forward.1} parent=23 // pred_region
        %s173 = smul.u32 2, %s18
        %p174 = scmp.lt.s32.totalorder %s17, 1
        %s175 = scalar_select %p174, %s17, 1
        %p176 = scmp.lt.s32.totalorder %s173, 1
        %s177 = scalar_select %p176, %s173, 1
        %s178 = smul.addr %s175, 2
        %s179 = sadd.s32 %s177, %s178
        %s180 = smul.addr %s179, 4
        %s181 = scalar_lea.vmem %s0, %s180
        %s182 = smul.u32 2, %s18
      $region28: #{_patch_embedding_forward.1} parent=23 // pred_fallthru
        _
    $region24: #{_patch_embedding_forward.1} parent=5 // pred_fallthru
      _
    %p183 = scmp.le.s32.totalorder 1, %s9
    %p184 = scmp.lt.s32.totalorder %s9, 3
    %p185 = pnand %p183, %p184
    %p186 = pneg %p185
    // Predicated region
    $region29: #{_patch_embedding_forward.1} parent=5 // pred_check
      _
    $region30: #{_patch_embedding_forward.1} parent=5 // pred_check_branch
      %188 = sbr.rel (%p185) target = $region32
    $region31: #{_patch_embedding_forward.1} parent=5 // pred_region
      %s189 = ssub.s32 %s9, 1
      %s190 = smul.u32 2, %s21
      %p191 = scmp.lt.s32.totalorder %s20, 1
      %s192 = scalar_select %p191, %s20, 1
      %p193 = scmp.lt.s32.totalorder %s190, 1
      %s194 = scalar_select %p193, %s190, 1
      %s195 = smul.addr %s192, 2
      %s196 = sadd.s32 %s194, %s195
      %s197 = smul.addr %s196, 4
      %s198 = scalar_lea.vmem %s0, %s197
      %p199 = pneg %p56
      %p200 = pneg %p53
      %p201 = scmp.lt.s32.totalorder %s19, 0
      %s202 = scalar_select %p201, %s19, 0
      %s203 = smul.addr %s202, 4
      %s204 = scalar_lea.vmem %s1, %s203
      %p205 = pneg %p82
      %p206 = pneg %p79
      %p207 = scmp.lt.s32.totalorder %s19, 0
      %s208 = scalar_select %p207, %s19, 0
      %s209 = scalar_lea.vmem %s2, %s208
      %p210 = pneg %p108
      %p211 = pneg %p105
      %p212 = pneg %p138
      %p213 = pneg %p135
      %s214 = smul.u32 4, %s19
      %p215 = scmp.lt.s32.totalorder %s20, 1
      %s216 = scalar_select %p215, %s20, 1
      %p217 = scmp.lt.s32.totalorder %s214, 3
      %s218 = scalar_select %p217, %s214, 3
      %p219 = scmp.lt.s32.totalorder %s21, 0
      %s220 = scalar_select %p219, %s21, 0
      %s221 = sadd.s32 %s220, %s218
      %s222 = smul.addr %s216, 4
      %s223 = sadd.s32 %s221, %s222
      %s224 = smul.addr %s223, 8
      %s225 = scalar_lea.vmem %s3, %s224
      %s226 = smul.u32 2, %s21
      %p227 = scmp.lt.s32.totalorder %s20, 1
      %s228 = scalar_select %p227, %s20, 1
      %p229 = scmp.lt.s32.totalorder %s226, 1
      %s230 = scalar_select %p229, %s226, 1
      %s231 = smul.addr %s228, 2
      %s232 = sadd.s32 %s230, %s231
      %s233 = smul.addr %s232, 4
      %s234 = scalar_lea.vmem %s0, %s233
      %s235 = smul.u32 2, %s21
      %p236 = scmp.lt.s32.totalorder %s19, 0
      %s237 = scalar_select %p236, %s19, 0
      %s238 = smul.addr %s237, 4
      %s239 = scalar_lea.vmem %s1, %s238
      %p240 = scmp.lt.s32.totalorder %s19, 0
      %s241 = scalar_select %p240, %s19, 0
      %s242 = scalar_lea.vmem %s2, %s241
      %s243 = smul.u32 4, %s19
      %p244 = scmp.lt.s32.totalorder %s20, 1
      %s245 = scalar_select %p244, %s20, 1
      %p246 = scmp.lt.s32.totalorder %s243, 3
      %s247 = scalar_select %p246, %s243, 3
      %p248 = scmp.lt.s32.totalorder %s21, 0
      %s249 = scalar_select %p248, %s21, 0
      %s250 = sadd.s32 %s249, %s247
      %s251 = smul.addr %s245, 4
      %s252 = sadd.s32 %s250, %s251
      %s253 = smul.addr %s252, 8
      %s254 = scalar_lea.vmem %s3, %s253
      %s255 = smul.u32 4, %s19
      %v257 = vld [vmem:[%s234] sm:$0xf]
      %v258 = vld [vmem:[%s234 + $0x4] sm:$0xf]
      %v259 = vld [vmem:[%s239] sm:$0xf]
      %v260 = vld [vmem:[%s239 + $0x4] sm:$0xf]
      %v261 = vld [vmem:[%s239 + $0x8] sm:$0xf]
      %v262 = vld [vmem:[%s239 + $0xc] sm:$0xf]
      %v263 = vld [vmem:[%s239 + $0x10] sm:$0xf]
      %v264 = vld [vmem:[%s239 + $0x14] sm:$0xf]
      %v265 = vld [vmem:[%s239 + $0x18] sm:$0xf]
      %v266 = vld [vmem:[%s239 + $0x1c] sm:$0xf]
      %v267 = vld [vmem:[%s242] sm:$0x1]
      %v269 = vlaneseq
      %v270 = vshrl.u32 %v269, 7
      %v271 = vsub.s32 0, %v270
      %v272 = vrot.slane %v267, %v271
      %v276 = vunpack.c.l.b16 %v257
      %v277 = vunpack.c.l.b16 %v258
      %v278 = vpack.c.b16 %v277, %v276
      %v287 = vunpack.c.l.b16 %v259
      %v288 = vunpack.c.l.b16 %v260
      %v289 = vunpack.c.l.b16 %v261
      %v290 = vunpack.c.l.b16 %v262
      %v291 = vunpack.c.l.b16 %v263
      %v292 = vunpack.c.l.b16 %v264
      %v293 = vunpack.c.l.b16 %v265
      %v294 = vunpack.c.l.b16 %v266
      %v295 = vpack.c.b16 %v288, %v287
      %v296 = vpack.c.b16 %v290, %v289
      %v297 = vpack.c.b16 %v292, %v291
      %v298 = vpack.c.b16 %v294, %v293
      %vm303 = vcmask 523264
      %v305 = vsel %vm303, %v278, 0
      %307 = vmatprep.subr.bf16.mxu0 0
      %308 = vmatpush1.bf16.msra.mxu0 %v295
      %309 = vmatprep.subr.bf16.mxu0 0
      %310 = vmatpush1.bf16.msra.mxu0 %v296
      %311 = vmatprep.subr.bf16.mxu0 0
      %312 = vmatpush1.bf16.msra.mxu0 %v297
      %313 = vmatprep.subr.bf16.mxu0 0
      %314 = vmatpush1.bf16.msra.mxu0 %v298
      %315 = vmatprep.subr.bf16.mxu0 0
      %316 = vmatpush1.bf16.msra.mxu0 0
      %317 = vmatprep.subr.bf16.mxu0 0
      %318 = vmatpush1.bf16.msra.mxu0 0
      %319 = vmatprep.subr.bf16.mxu0 0
      %320 = vmatpush1.bf16.msra.mxu0 0
      %321 = vmatprep.subr.bf16.mxu0 0
      %322 = vmatpush1.bf16.msra.mxu0 0
      %323 = vmatprep.subr.bf16.mxu0 0
      %324 = vmatpush1.bf16.msra.mxu0 0
      %325 = vmatprep.subr.bf16.mxu0 0
      %326 = vmatpush1.bf16.msra.mxu0 0
      %327 = vmatprep.subr.bf16.mxu0 0
      %328 = vmatpush1.bf16.msra.mxu0 0
      %329 = vmatprep.subr.bf16.mxu0 0
      %330 = vmatpush1.bf16.msra.mxu0 0
      %331 = vmatprep.subr.bf16.mxu0 0
      %332 = vmatpush1.bf16.msra.mxu0 0
      %333 = vmatprep.subr.bf16.mxu0 0
      %334 = vmatpush1.bf16.msra.mxu0 0
      %335 = vmatprep.subr.bf16.mxu0 0
      %336 = vmatpush1.bf16.msra.mxu0 0
      %337 = vmatprep.subr.bf16.mxu0 0
      %338 = vmatpush1.bf16.msra.mxu0 0
      %339 = vmatprep.mubr.bf16.mxu0 0
      %340 = vmatmul.mubr.bf16.gmra.mrb[0].mxu0 %v305
      %v341 = vpop.f32.mrb[0].mxu0
      %v342 = vadd.f32 %v272, %v341
      %v343 = vpop.f32.mrb[0].mxu0
      %v344 = vpop.f32.mrb[0].mxu0
      %v345 = vadd.f32 %v272, %v344
      %v346 = vpop.f32.mrb[0].mxu0
      %347 = vdwg.mxu0
      %348 = vxpose.xlu0.b32.start [1/16] %v342, 128
      %349 = vxpose.xlu0.b32.cont [2/16] %v345, 128
      %350 = vxpose.xlu0.b32.cont [3/16] 0.0, 128
      %351 = vxpose.xlu0.b32.cont [4/16] 0.0, 128
      %352 = vxpose.xlu0.b32.cont [5/16] 0.0, 128
      %353 = vxpose.xlu0.b32.cont [6/16] 0.0, 128
      %354 = vxpose.xlu0.b32.cont [7/16] 0.0, 128
      %355 = vxpose.xlu0.b32.cont [8/16] 0.0, 128
      %356 = vxpose.xlu0.b32.cont [9/16] 0.0, 128
      %357 = vxpose.xlu0.b32.cont [10/16] 0.0, 128
      %358 = vxpose.xlu0.b32.cont [11/16] 0.0, 128
      %359 = vxpose.xlu0.b32.cont [12/16] 0.0, 128
      %360 = vxpose.xlu0.b32.cont [13/16] 0.0, 128
      %361 = vxpose.xlu0.b32.cont [14/16] 0.0, 128
      %362 = vxpose.xlu0.b32.cont [15/16] 0.0, 128
      %363 = vxpose.xlu0.b32.end [16/16] 0.0, 128
      %v364 = vpop.trf.xlu0
      %v365 = vpop.trf.xlu0
      %v366 = vpop.trf.xlu0
      %v367 = vpop.trf.xlu0
      %v368 = vpop.trf.xlu0
      %v369 = vpop.trf.xlu0
      %v370 = vpop.trf.xlu0
      %v371 = vpop.trf.xlu0
      %v372 = vpop.trf.xlu0
      %v373 = vpop.trf.xlu0
      %v374 = vpop.trf.xlu0
      %v375 = vpop.trf.xlu0
      %v376 = vpop.trf.xlu0
      %v377 = vpop.trf.xlu0
      %v378 = vpop.trf.xlu0
      %v379 = vpop.trf.xlu0
      %vm380 = vcmask 130048
      %381 = vst.msk [vmem:[%s254] sm:$0xff] %vm380, %v364
      %382 = vst.msk [vmem:[%s254 + $0x8] sm:$0xff] %vm380, %v365
      %383 = vst.msk [vmem:[%s254 + $0x10] sm:$0xff] %vm380, %v366
      %384 = vst.msk [vmem:[%s254 + $0x18] sm:$0xff] %vm380, %v367
      %s385 = smul.u32 4, %s19
      %p386 = scmp.lt.s32.totalorder %s20, 1
      %s387 = scalar_select %p386, %s20, 1
      %p388 = scmp.lt.s32.totalorder %s385, 3
      %s389 = scalar_select %p388, %s385, 3
      %p390 = scmp.lt.s32.totalorder %s21, 0
      %s391 = scalar_select %p390, %s21, 0
      %s392 = sadd.s32 %s391, %s389
      %s393 = smul.addr %s387, 4
      %s394 = sadd.s32 %s392, %s393
      %s395 = smul.addr %s394, 8
      %s396 = scalar_lea.vmem %s3, %s395
      // Predicated region
      $region33: #{_patch_embedding_forward.1} parent=31 // pred_check
        %p397 = pneg %p135
      $region34: #{_patch_embedding_forward.1} parent=31 // pred_check_branch
        %399 = sbr.rel (%p397) target = $region36
      $region35: #{_patch_embedding_forward.1} parent=31 // pred_region
        %s400 = smul.u32 4, %s19
      $region36: #{_patch_embedding_forward.1} parent=31 // pred_fallthru
        _
    $region32: #{_patch_embedding_forward.1} parent=5 // pred_fallthru
      _
    %p401 = scmp.le.s32.totalorder 2, %s9
    // Predicated region
    $region37: #{_patch_embedding_forward.1} parent=5 // pred_check
      %p402 = pneg %p401
    $region38: #{_patch_embedding_forward.1} parent=5 // pred_check_branch
      %404 = sbr.rel (%p402) target = $region40
    $region39: #{_patch_embedding_forward.1} parent=5 // pred_region
      %s405 = ssub.s32 %s9, 2
      // Predicated region
      $region41: #{_patch_embedding_forward.1} parent=39 // pred_check
        %p406 = pneg %p141
      $region42: #{_patch_embedding_forward.1} parent=39 // pred_check_branch
        %408 = sbr.rel (%p406) target = $region44
      $region43: #{_patch_embedding_forward.1} parent=39 // pred_region
        %s409 = smul.u32 4, %s22
        %p410 = scmp.lt.s32.totalorder %s23, 1
        %s411 = scalar_select %p410, %s23, 1
        %p412 = scmp.lt.s32.totalorder %s409, 3
        %s413 = scalar_select %p412, %s409, 3
        %p414 = scmp.lt.s32.totalorder %s24, 0
        %s415 = scalar_select %p414, %s24, 0
        %s416 = sadd.s32 %s415, %s413
        %s417 = smul.addr %s411, 4
        %s418 = sadd.s32 %s416, %s417
        %s419 = smul.addr %s418, 8
        %s420 = scalar_lea.vmem %s3, %s419
      $region44: #{_patch_embedding_forward.1} parent=39 // pred_fallthru
        _
    $region40: #{_patch_embedding_forward.1} parent=5 // pred_fallthru
      _
  $region6: #{_patch_embedding_forward.1} parent=0 // loop_footer
    %s13 = sadd.s32 1, %s9
  $region7: #{_patch_embedding_forward.1} parent=0 // loop_footer_branch
    %8 = sbr.rel target = $region3
  $region8: #{_patch_embedding_forward.1} parent=0 // loop_exit
    _

</llo_original>
